<compile_context>
chip_gen: v5e
topology: v5e:2x2
jax: 0.10.0
libtpu: 0.0.40
codegen_flags: <defaults>
</compile_context>

<pallas_src>
import functools

import numpy as np
import jax
import jax.numpy as jnp
from jax.experimental import pallas as pl
from jax.experimental.pallas import tpu as pltpu


def _boundary_masks(H, W, d):
    """(9, H*W) f32 masks: 1.0 where the 3x3 tap (dilation d) reads inside the image."""
    row = np.arange(H)[:, None]
    col = np.arange(W)[None, :]
    masks = []
    for kh in range(3):
        for kw in range(3):
            oh, ow = d * (kh - 1), d * (kw - 1)
            ok = (row + oh >= 0) & (row + oh < H) & (col + ow >= 0) & (col + ow < W)
            masks.append(ok.astype(np.float32).reshape(H * W))
    return jnp.asarray(np.stack(masks, axis=0))


def _fold_weights(w, scale, bias, C, Nb):
    """Build the (R, 10*R) block-diagonal-over-images matmul weights, R = Nb*C.

    Column tap*R + n*C + ci of row n*C + co holds conv weight w[tap][ci, co] with the
    eval-mode BN scale folded in; columns [9R:10R] hold diag(bias tiled over images)
    and are contracted against a constant-ones block inside the kernel, so the MXU
    matmul directly yields conv(x) * bn_scale + bn_bias.
    """
    R = Nb * C
    wf = np.asarray(w, np.float32) * np.asarray(scale, np.float32)[None, None, None, :]
    wf = wf.reshape(9, C, C).transpose(2, 0, 1)            # (cout, tap, cin)
    Wb = np.zeros((R, 10 * R), np.float32)
    for n in range(Nb):
        for tap in range(9):
            Wb[n * C:(n + 1) * C, tap * R + n * C: tap * R + (n + 1) * C] = wf[:, tap, :]
    Wb[:, 9 * R:10 * R] = np.diag(np.tile(np.asarray(bias, np.float32), Nb))
    return jnp.asarray(Wb)


def _basic_block_kernel(x_ref, w1_ref, w2_ref, m_ref, o_ref, scr_ref, stk_ref,
                        *, H, W, C, Nb, d1, d2, pad, m2_off):
    HW = H * W
    R = Nb * C
    maxt = max(d1, d2) * (W + 1)

    x = x_ref[...]                                           # (R, HW) residual, stays resident

    # Halo-only zeroing: shifted reads only ever touch [pad-maxt, pad) and
    # [pad+HW, pad+HW+maxt); the interior is fully overwritten below.
    scr_ref[:, pad - maxt:pad] = jnp.zeros((R, maxt), jnp.float32)
    scr_ref[:, pad + HW:pad + HW + maxt] = jnp.zeros((R, maxt), jnp.float32)

    # Constant-ones block: contracted against the diag(bias) columns of the weights,
    # written once and reused by both convs (conv writes only touch rows [0:9R)).
    stk_ref[9 * R:10 * R, :] = jnp.ones((R, HW), jnp.float32)

    def conv(w_ref, mask_off, d):
        tap = 0
        for kh in range(3):
            for kw in range(3):
                t = (kh - 1) * d * W + (kw - 1) * d
                src = scr_ref[:, pad + t:pad + t + HW]       # lane-shifted window (R, HW)
                if not (kh == 1 and kw == 1):                # centre tap is always in-image
                    src = src * m_ref[mask_off + tap:mask_off + tap + 1, :]
                stk_ref[tap * R:(tap + 1) * R, :] = src      # 8-row aligned slab store
                tap += 1
        # (R, 10R) @ (10R, HW): conv + BN bias for all Nb images in one MXU matmul.
        return jnp.dot(w_ref[...], stk_ref[...], preferred_element_type=jnp.float32)

    scr_ref[:, pad:pad + HW] = x
    h = jnp.maximum(conv(w1_ref, 0, d1), 0.0)                # conv1 + bn1 + relu
    scr_ref[:, pad:pad + HW] = h                             # intermediate never touches HBM
    o = conv(w2_ref, m2_off, d2) + x                         # conv2 + bn2 + residual
    o_ref[...] = jnp.maximum(o, 0.0).astype(o_ref.dtype)


def basic_block_forward(x_nchw, w1, scale1, bias1, w2, scale2, bias2,
                        *, dilation=1, previous_dilation=1):
    """x_nchw: (N, C, H, W) f32.  Returns (N, C, H, W) f32."""
    N, C, H, W = x_nchw.shape
    assert w1.shape[-1] == C and w2.shape[-1] == C, "downsample=None needs inplanes == planes"
    HW = H * W

    # Pack Nb images' channel planes onto the sublane axis (target 8 sublanes).
    Nb = max(1, 8 // C) if C < 8 else 1
    Nb = min(Nb, N)
    while N % Nb:
        Nb -= 1
    R = Nb * C
    K = 10 * R

    w1b = _fold_weights(w1, scale1, bias1, C, Nb)            # (R, K), BN folded
    w2b = _fold_weights(w2, scale2, bias2, C, Nb)

    if dilation == previous_dilation:
        masks = _boundary_masks(H, W, dilation)              # single (9, HW) mask, shared
        m2_off = 0
    else:
        masks = jnp.concatenate([_boundary_masks(H, W, dilation),
                                 _boundary_masks(H, W, previous_dilation)], axis=0)
        m2_off = 9

    maxt = max(dilation, previous_dilation) * (W + 1)
    pad = ((maxt + 127) // 128) * 128                        # lane-aligned interior writes

    x_rows = x_nchw.reshape(N * C, HW)                       # free metadata reshape (NCHW)

    kern = functools.partial(_basic_block_kernel, H=H, W=W, C=C, Nb=Nb,
                             d1=dilation, d2=previous_dilation, pad=pad, m2_off=m2_off)

    out = pl.pallas_call(
        kern,
        out_shape=jax.ShapeDtypeStruct((N * C, HW), x_rows.dtype),
        grid_spec=pltpu.PrefetchScalarGridSpec(
            num_scalar_prefetch=0,
            grid=(N // Nb,),                                 # Nb images per step
            in_specs=[
                pl.BlockSpec((R, HW), lambda b: (b, 0)),         # packed planes (lane-dense)
                pl.BlockSpec((R, K), lambda b: (0, 0)),          # conv1 weights (BN + bias folded)
                pl.BlockSpec((R, K), lambda b: (0, 0)),          # conv2 weights (BN + bias folded)
                pl.BlockSpec(tuple(masks.shape), lambda b: (0, 0)),  # boundary masks (deduped)
            ],
            out_specs=pl.BlockSpec((R, HW), lambda b: (b, 0)),   # lane-dense output
            scratch_shapes=[pltpu.VMEM((R, HW + 2 * pad), jnp.float32),   # haloed planes
                            pltpu.VMEM((K, HW), jnp.float32)],            # stacked windows + ones
        ),
        compiler_params=pltpu.CompilerParams(dimension_semantics=("parallel",)),
    )(x_rows, w1b, w2b, masks)
    return out.reshape(N, C, H, W)


class BasicBlockPallas:
    """ResNet BasicBlock: conv3x3-BN-ReLU -> conv3x3-BN -> (+residual) -> ReLU (eval-mode BN)."""
    expansion = 1

    def __init__(self, inplanes, planes, key, stride=1, dilation=1,
                 previous_dilation=1, eps=1e-5):
        assert stride == 1 and inplanes == planes, \
            "only the stride=1 / downsample=None path is implemented"
        k1, k2 = jax.random.split(key)
        self.w1 = jax.random.normal(k1, (3, 3, inplanes, planes), jnp.float32) * (2.0 / (9 * inplanes)) ** 0.5
        self.w2 = jax.random.normal(k2, (3, 3, planes, planes), jnp.float32) * (2.0 / (9 * planes)) ** 0.5
        self.dilation = dilation
        self.previous_dilation = previous_dilation

        # deterministic eval-mode BatchNorm parameters, folded into scale/bias
        c = jnp.arange(planes, dtype=jnp.float32)
        gamma1, beta1 = 1.0 + 0.01 * c, 0.02 * c
        mean1, var1 = 0.05 * c, 1.0 + 0.1 * c
        gamma2, beta2 = 1.0 - 0.01 * c, -0.03 * c
        mean2, var2 = -0.04 * c, 1.0 + 0.05 * c
        self.scale1 = gamma1 / jnp.sqrt(var1 + eps)
        self.bias1 = beta1 - mean1 * self.scale1
        self.scale2 = gamma2 / jnp.sqrt(var2 + eps)
        self.bias2 = beta2 - mean2 * self.scale2

    def __call__(self, x_nchw):
        return basic_block_forward(x_nchw, self.w1, self.scale1, self.bias1,
                                   self.w2, self.scale2, self.bias2,
                                   dilation=self.dilation,
                                   previous_dilation=self.previous_dilation)


def _reference_forward(x_nchw, blk):
    """Pure-JAX reference (lax conv, NCHW) with identical semantics."""
    def conv(x, w, d):
        return jax.lax.conv_general_dilated(
            x, w, window_strides=(1, 1), padding=[(d, d), (d, d)],
            rhs_dilation=(d, d), dimension_numbers=("NCHW", "HWIO", "NCHW"))
    s1 = blk.scale1[None, :, None, None]; b1 = blk.bias1[None, :, None, None]
    s2 = blk.scale2[None, :, None, None]; b2 = blk.bias2[None, :, None, None]
    o = jnp.maximum(conv(x_nchw, blk.w1, blk.dilation) * s1 + b1, 0.0)
    o = conv(o, blk.w2, blk.previous_dilation) * s2 + b2
    return jnp.maximum(o + x_nchw, 0.0)


if __name__ == "__main__":
    key = jax.random.PRNGKey(0)
    kx, kw = jax.random.split(key)

    N, C, H, W = 2, 4, 16, 16                      # inplanes = planes = 4, stride = 1
    x_nchw = jax.random.normal(kx, (N, C, H, W), jnp.float32)

    block = BasicBlockPallas(inplanes=C, planes=C, key=kw)

    out = jax.block_until_ready(block(x_nchw))     # single fused pallas_call
    ref = _reference_forward(x_nchw, block)

    assert out.shape == (N, C, H, W)
    assert jnp.allclose(out, ref, atol=1e-4, rtol=1e-4), "mismatch vs lax.conv reference"
    print("KERNEL_OK")
</pallas_src>

<mosaic_0001>
module attributes {stable_mosaic.version = 11 : i64} {
  func.func @_basic_block_kernel(%arg0: i32, %arg1: memref<8x256xf32, #tpu.memory_space<vmem>>, %arg2: memref<8x80xf32, #tpu.memory_space<vmem>>, %arg3: memref<8x80xf32, #tpu.memory_space<vmem>>, %arg4: memref<9x256xf32, #tpu.memory_space<vmem>>, %arg5: memref<8x256xf32, #tpu.memory_space<vmem>>, %arg6: memref<8x512xf32, #tpu.memory_space<vmem>>, %arg7: memref<80x256xf32, #tpu.memory_space<vmem>>) attributes {dimension_semantics = [#tpu.dimension_semantics<parallel>], iteration_bounds = array<i64: 1>, scalar_prefetch = 0 : i64, scratch_operands = 2 : i64, tpu.core_type = #tpu.core_type<tc>, window_params = [{transform_indices = @transform_0, window_bounds = array<i64: 8, 256>}, {pipeline_mode = #tpu.pipeline_mode<synchronous>, transform_indices = @transform_1, window_bounds = array<i64: 8, 80>}, {pipeline_mode = #tpu.pipeline_mode<synchronous>, transform_indices = @transform_2, window_bounds = array<i64: 8, 80>}, {pipeline_mode = #tpu.pipeline_mode<synchronous>, transform_indices = @transform_3, window_bounds = array<i64: 9, 256>}, {transform_indices = @transform_4, window_bounds = array<i64: 8, 256>}]} {
    %c0 = arith.constant 0 : index
    %c0_0 = arith.constant 0 : index
    %0 = vector.load %arg1[%c0, %c0_0] : memref<8x256xf32, #tpu.memory_space<vmem>>, vector<8x256xf32>
    %cst = arith.constant 0.000000e+00 : f32
    %1 = vector.broadcast %cst : f32 to vector<8x17xf32>
    %c0_1 = arith.constant 0 : index
    %c111 = arith.constant 111 : index
    %2 = vector.load %arg6[%c0_1, %c111] : memref<8x512xf32, #tpu.memory_space<vmem>>, vector<8x17xf32>
    tpu.vector_store %arg6[%c0_1, %c111], %1 {strides = array<i32>} : memref<8x512xf32, #tpu.memory_space<vmem>>, vector<8x17xf32>,
    %cst_2 = arith.constant 0.000000e+00 : f32
    %3 = vector.broadcast %cst_2 : f32 to vector<8x17xf32>
    %c0_3 = arith.constant 0 : index
    %c384 = arith.constant 384 : index
    %4 = vector.load %arg6[%c0_3, %c384] : memref<8x512xf32, #tpu.memory_space<vmem>>, vector<8x17xf32>
    tpu.vector_store %arg6[%c0_3, %c384], %3 {strides = array<i32>} : memref<8x512xf32, #tpu.memory_space<vmem>>, vector<8x17xf32>,
    %cst_4 = arith.constant 1.000000e+00 : f32
    %5 = vector.broadcast %cst_4 : f32 to vector<8x256xf32>
    %c72 = arith.constant 72 : index
    %c0_5 = arith.constant 0 : index
    %6 = vector.load %arg7[%c72, %c0_5] : memref<80x256xf32, #tpu.memory_space<vmem>>, vector<8x256xf32>
    tpu.vector_store %arg7[%c72, %c0_5], %5 {strides = array<i32>} : memref<80x256xf32, #tpu.memory_space<vmem>>, vector<8x256xf32>,
    %c0_6 = arith.constant 0 : index
    %c128 = arith.constant 128 : index
    %7 = vector.load %arg6[%c0_6, %c128] : memref<8x512xf32, #tpu.memory_space<vmem>>, vector<8x256xf32>
    tpu.vector_store %arg6[%c0_6, %c128], %0 {strides = array<i32>} : memref<8x512xf32, #tpu.memory_space<vmem>>, vector<8x256xf32>,
    %c0_7 = arith.constant 0 : index
    %c111_8 = arith.constant 111 : index
    %8 = vector.load %arg6[%c0_7, %c111_8] : memref<8x512xf32, #tpu.memory_space<vmem>>, vector<8x256xf32>
    %c0_9 = arith.constant 0 : index
    %c0_10 = arith.constant 0 : index
    %9 = vector.load %arg4[%c0_9, %c0_10] : memref<9x256xf32, #tpu.memory_space<vmem>>, vector<1x256xf32>
    %10 = vector.broadcast %9 : vector<1x256xf32> to vector<8x256xf32>
    %11 = arith.mulf %8, %10 : vector<8x256xf32>
    %c0_11 = arith.constant 0 : index
    %c0_12 = arith.constant 0 : index
    %12 = vector.load %arg7[%c0_11, %c0_12] : memref<80x256xf32, #tpu.memory_space<vmem>>, vector<8x256xf32>
    tpu.vector_store %arg7[%c0_11, %c0_12], %11 {strides = array<i32>} : memref<80x256xf32, #tpu.memory_space<vmem>>, vector<8x256xf32>,
    %c0_13 = arith.constant 0 : index
    %c112 = arith.constant 112 : index
    %13 = vector.load %arg6[%c0_13, %c112] : memref<8x512xf32, #tpu.memory_space<vmem>>, vector<8x256xf32>
    %c1 = arith.constant 1 : index
    %c0_14 = arith.constant 0 : index
    %14 = vector.load %arg4[%c1, %c0_14] : memref<9x256xf32, #tpu.memory_space<vmem>>, vector<1x256xf32>
    %15 = vector.broadcast %14 : vector<1x256xf32> to vector<8x256xf32>
    %16 = arith.mulf %13, %15 : vector<8x256xf32>
    %c8 = arith.constant 8 : index
    %c0_15 = arith.constant 0 : index
    %17 = vector.load %arg7[%c8, %c0_15] : memref<80x256xf32, #tpu.memory_space<vmem>>, vector<8x256xf32>
    tpu.vector_store %arg7[%c8, %c0_15], %16 {strides = array<i32>} : memref<80x256xf32, #tpu.memory_space<vmem>>, vector<8x256xf32>,
    %c0_16 = arith.constant 0 : index
    %c113 = arith.constant 113 : index
    %18 = vector.load %arg6[%c0_16, %c113] : memref<8x512xf32, #tpu.memory_space<vmem>>, vector<8x256xf32>
    %c2 = arith.constant 2 : index
    %c0_17 = arith.constant 0 : index
    %19 = vector.load %arg4[%c2, %c0_17] : memref<9x256xf32, #tpu.memory_space<vmem>>, vector<1x256xf32>
    %20 = vector.broadcast %19 : vector<1x256xf32> to vector<8x256xf32>
    %21 = arith.mulf %18, %20 : vector<8x256xf32>
    %c16 = arith.constant 16 : index
    %c0_18 = arith.constant 0 : index
    %22 = vector.load %arg7[%c16, %c0_18] : memref<80x256xf32, #tpu.memory_space<vmem>>, vector<8x256xf32>
    tpu.vector_store %arg7[%c16, %c0_18], %21 {strides = array<i32>} : memref<80x256xf32, #tpu.memory_space<vmem>>, vector<8x256xf32>,
    %c0_19 = arith.constant 0 : index
    %c127 = arith.constant 127 : index
    %23 = vector.load %arg6[%c0_19, %c127] : memref<8x512xf32, #tpu.memory_space<vmem>>, vector<8x256xf32>
    %c3 = arith.constant 3 : index
    %c0_20 = arith.constant 0 : index
    %24 = vector.load %arg4[%c3, %c0_20] : memref<9x256xf32, #tpu.memory_space<vmem>>, vector<1x256xf32>
    %25 = vector.broadcast %24 : vector<1x256xf32> to vector<8x256xf32>
    %26 = arith.mulf %23, %25 : vector<8x256xf32>
    %c24 = arith.constant 24 : index
    %c0_21 = arith.constant 0 : index
    %27 = vector.load %arg7[%c24, %c0_21] : memref<80x256xf32, #tpu.memory_space<vmem>>, vector<8x256xf32>
    tpu.vector_store %arg7[%c24, %c0_21], %26 {strides = array<i32>} : memref<80x256xf32, #tpu.memory_space<vmem>>, vector<8x256xf32>,
    %c0_22 = arith.constant 0 : index
    %c128_23 = arith.constant 128 : index
    %28 = vector.load %arg6[%c0_22, %c128_23] : memref<8x512xf32, #tpu.memory_space<vmem>>, vector<8x256xf32>
    %c32 = arith.constant 32 : index
    %c0_24 = arith.constant 0 : index
    %29 = vector.load %arg7[%c32, %c0_24] : memref<80x256xf32, #tpu.memory_space<vmem>>, vector<8x256xf32>
    tpu.vector_store %arg7[%c32, %c0_24], %28 {strides = array<i32>} : memref<80x256xf32, #tpu.memory_space<vmem>>, vector<8x256xf32>,
    %c0_25 = arith.constant 0 : index
    %c129 = arith.constant 129 : index
    %30 = vector.load %arg6[%c0_25, %c129] : memref<8x512xf32, #tpu.memory_space<vmem>>, vector<8x256xf32>
    %c5 = arith.constant 5 : index
    %c0_26 = arith.constant 0 : index
    %31 = vector.load %arg4[%c5, %c0_26] : memref<9x256xf32, #tpu.memory_space<vmem>>, vector<1x256xf32>
    %32 = vector.broadcast %31 : vector<1x256xf32> to vector<8x256xf32>
    %33 = arith.mulf %30, %32 : vector<8x256xf32>
    %c40 = arith.constant 40 : index
    %c0_27 = arith.constant 0 : index
    %34 = vector.load %arg7[%c40, %c0_27] : memref<80x256xf32, #tpu.memory_space<vmem>>, vector<8x256xf32>
    tpu.vector_store %arg7[%c40, %c0_27], %33 {strides = array<i32>} : memref<80x256xf32, #tpu.memory_space<vmem>>, vector<8x256xf32>,
    %c0_28 = arith.constant 0 : index
    %c143 = arith.constant 143 : index
    %35 = vector.load %arg6[%c0_28, %c143] : memref<8x512xf32, #tpu.memory_space<vmem>>, vector<8x256xf32>
    %c6 = arith.constant 6 : index
    %c0_29 = arith.constant 0 : index
    %36 = vector.load %arg4[%c6, %c0_29] : memref<9x256xf32, #tpu.memory_space<vmem>>, vector<1x256xf32>
    %37 = vector.broadcast %36 : vector<1x256xf32> to vector<8x256xf32>
    %38 = arith.mulf %35, %37 : vector<8x256xf32>
    %c48 = arith.constant 48 : index
    %c0_30 = arith.constant 0 : index
    %39 = vector.load %arg7[%c48, %c0_30] : memref<80x256xf32, #tpu.memory_space<vmem>>, vector<8x256xf32>
    tpu.vector_store %arg7[%c48, %c0_30], %38 {strides = array<i32>} : memref<80x256xf32, #tpu.memory_space<vmem>>, vector<8x256xf32>,
    %c0_31 = arith.constant 0 : index
    %c144 = arith.constant 144 : index
    %40 = vector.load %arg6[%c0_31, %c144] : memref<8x512xf32, #tpu.memory_space<vmem>>, vector<8x256xf32>
    %c7 = arith.constant 7 : index
    %c0_32 = arith.constant 0 : index
    %41 = vector.load %arg4[%c7, %c0_32] : memref<9x256xf32, #tpu.memory_space<vmem>>, vector<1x256xf32>
    %42 = vector.broadcast %41 : vector<1x256xf32> to vector<8x256xf32>
    %43 = arith.mulf %40, %42 : vector<8x256xf32>
    %c56 = arith.constant 56 : index
    %c0_33 = arith.constant 0 : index
    %44 = vector.load %arg7[%c56, %c0_33] : memref<80x256xf32, #tpu.memory_space<vmem>>, vector<8x256xf32>
    tpu.vector_store %arg7[%c56, %c0_33], %43 {strides = array<i32>} : memref<80x256xf32, #tpu.memory_space<vmem>>, vector<8x256xf32>,
    %c0_34 = arith.constant 0 : index
    %c145 = arith.constant 145 : index
    %45 = vector.load %arg6[%c0_34, %c145] : memref<8x512xf32, #tpu.memory_space<vmem>>, vector<8x256xf32>
    %c8_35 = arith.constant 8 : index
    %c0_36 = arith.constant 0 : index
    %46 = vector.load %arg4[%c8_35, %c0_36] : memref<9x256xf32, #tpu.memory_space<vmem>>, vector<1x256xf32>
    %47 = vector.broadcast %46 : vector<1x256xf32> to vector<8x256xf32>
    %48 = arith.mulf %45, %47 : vector<8x256xf32>
    %c64 = arith.constant 64 : index
    %c0_37 = arith.constant 0 : index
    %49 = vector.load %arg7[%c64, %c0_37] : memref<80x256xf32, #tpu.memory_space<vmem>>, vector<8x256xf32>
    tpu.vector_store %arg7[%c64, %c0_37], %48 {strides = array<i32>} : memref<80x256xf32, #tpu.memory_space<vmem>>, vector<8x256xf32>,
    %c0_38 = arith.constant 0 : index
    %c0_39 = arith.constant 0 : index
    %50 = vector.load %arg2[%c0_38, %c0_39] : memref<8x80xf32, #tpu.memory_space<vmem>>, vector<8x80xf32>
    %c0_40 = arith.constant 0 : index
    %c0_41 = arith.constant 0 : index
    %51 = vector.load %arg7[%c0_40, %c0_41] : memref<80x256xf32, #tpu.memory_space<vmem>>, vector<80x256xf32>
    %cst_42 = arith.constant dense<0.000000e+00> : vector<8x256xf32>
    %52 = tpu.matmul %50, %51, %cst_42 {dimension_numbers = #tpu.dot_dimension_numbers<[1], [0], [0], [1], [0, 0, 1, 1], [], []>} : vector<8x80xf32>, vector<80x256xf32>, vector<8x256xf32> -> vector<8x256xf32>
    %cst_43 = arith.constant 0.000000e+00 : f32
    %53 = vector.broadcast %cst_43 : f32 to vector<8x256xf32>
    %54 = arith.maximumf %52, %53 : vector<8x256xf32>
    %c0_44 = arith.constant 0 : index
    %c128_45 = arith.constant 128 : index
    %55 = vector.load %arg6[%c0_44, %c128_45] : memref<8x512xf32, #tpu.memory_space<vmem>>, vector<8x256xf32>
    tpu.vector_store %arg6[%c0_44, %c128_45], %54 {strides = array<i32>} : memref<8x512xf32, #tpu.memory_space<vmem>>, vector<8x256xf32>,
    %c0_46 = arith.constant 0 : index
    %c111_47 = arith.constant 111 : index
    %56 = vector.load %arg6[%c0_46, %c111_47] : memref<8x512xf32, #tpu.memory_space<vmem>>, vector<8x256xf32>
    %c0_48 = arith.constant 0 : index
    %c0_49 = arith.constant 0 : index
    %57 = vector.load %arg4[%c0_48, %c0_49] : memref<9x256xf32, #tpu.memory_space<vmem>>, vector<1x256xf32>
    %58 = vector.broadcast %57 : vector<1x256xf32> to vector<8x256xf32>
    %59 = arith.mulf %56, %58 : vector<8x256xf32>
    %c0_50 = arith.constant 0 : index
    %c0_51 = arith.constant 0 : index
    %60 = vector.load %arg7[%c0_50, %c0_51] : memref<80x256xf32, #tpu.memory_space<vmem>>, vector<8x256xf32>
    tpu.vector_store %arg7[%c0_50, %c0_51], %59 {strides = array<i32>} : memref<80x256xf32, #tpu.memory_space<vmem>>, vector<8x256xf32>,
    %c0_52 = arith.constant 0 : index
    %c112_53 = arith.constant 112 : index
    %61 = vector.load %arg6[%c0_52, %c112_53] : memref<8x512xf32, #tpu.memory_space<vmem>>, vector<8x256xf32>
    %c1_54 = arith.constant 1 : index
    %c0_55 = arith.constant 0 : index
    %62 = vector.load %arg4[%c1_54, %c0_55] : memref<9x256xf32, #tpu.memory_space<vmem>>, vector<1x256xf32>
    %63 = vector.broadcast %62 : vector<1x256xf32> to vector<8x256xf32>
    %64 = arith.mulf %61, %63 : vector<8x256xf32>
    %c8_56 = arith.constant 8 : index
    %c0_57 = arith.constant 0 : index
    %65 = vector.load %arg7[%c8_56, %c0_57] : memref<80x256xf32, #tpu.memory_space<vmem>>, vector<8x256xf32>
    tpu.vector_store %arg7[%c8_56, %c0_57], %64 {strides = array<i32>} : memref<80x256xf32, #tpu.memory_space<vmem>>, vector<8x256xf32>,
    %c0_58 = arith.constant 0 : index
    %c113_59 = arith.constant 113 : index
    %66 = vector.load %arg6[%c0_58, %c113_59] : memref<8x512xf32, #tpu.memory_space<vmem>>, vector<8x256xf32>
    %c2_60 = arith.constant 2 : index
    %c0_61 = arith.constant 0 : index
    %67 = vector.load %arg4[%c2_60, %c0_61] : memref<9x256xf32, #tpu.memory_space<vmem>>, vector<1x256xf32>
    %68 = vector.broadcast %67 : vector<1x256xf32> to vector<8x256xf32>
    %69 = arith.mulf %66, %68 : vector<8x256xf32>
    %c16_62 = arith.constant 16 : index
    %c0_63 = arith.constant 0 : index
    %70 = vector.load %arg7[%c16_62, %c0_63] : memref<80x256xf32, #tpu.memory_space<vmem>>, vector<8x256xf32>
    tpu.vector_store %arg7[%c16_62, %c0_63], %69 {strides = array<i32>} : memref<80x256xf32, #tpu.memory_space<vmem>>, vector<8x256xf32>,
    %c0_64 = arith.constant 0 : index
    %c127_65 = arith.constant 127 : index
    %71 = vector.load %arg6[%c0_64, %c127_65] : memref<8x512xf32, #tpu.memory_space<vmem>>, vector<8x256xf32>
    %c3_66 = arith.constant 3 : index
    %c0_67 = arith.constant 0 : index
    %72 = vector.load %arg4[%c3_66, %c0_67] : memref<9x256xf32, #tpu.memory_space<vmem>>, vector<1x256xf32>
    %73 = vector.broadcast %72 : vector<1x256xf32> to vector<8x256xf32>
    %74 = arith.mulf %71, %73 : vector<8x256xf32>
    %c24_68 = arith.constant 24 : index
    %c0_69 = arith.constant 0 : index
    %75 = vector.load %arg7[%c24_68, %c0_69] : memref<80x256xf32, #tpu.memory_space<vmem>>, vector<8x256xf32>
    tpu.vector_store %arg7[%c24_68, %c0_69], %74 {strides = array<i32>} : memref<80x256xf32, #tpu.memory_space<vmem>>, vector<8x256xf32>,
    %c0_70 = arith.constant 0 : index
    %c128_71 = arith.constant 128 : index
    %76 = vector.load %arg6[%c0_70, %c128_71] : memref<8x512xf32, #tpu.memory_space<vmem>>, vector<8x256xf32>
    %c32_72 = arith.constant 32 : index
    %c0_73 = arith.constant 0 : index
    %77 = vector.load %arg7[%c32_72, %c0_73] : memref<80x256xf32, #tpu.memory_space<vmem>>, vector<8x256xf32>
    tpu.vector_store %arg7[%c32_72, %c0_73], %76 {strides = array<i32>} : memref<80x256xf32, #tpu.memory_space<vmem>>, vector<8x256xf32>,
    %c0_74 = arith.constant 0 : index
    %c129_75 = arith.constant 129 : index
    %78 = vector.load %arg6[%c0_74, %c129_75] : memref<8x512xf32, #tpu.memory_space<vmem>>, vector<8x256xf32>
    %c5_76 = arith.constant 5 : index
    %c0_77 = arith.constant 0 : index
    %79 = vector.load %arg4[%c5_76, %c0_77] : memref<9x256xf32, #tpu.memory_space<vmem>>, vector<1x256xf32>
    %80 = vector.broadcast %79 : vector<1x256xf32> to vector<8x256xf32>
    %81 = arith.mulf %78, %80 : vector<8x256xf32>
    %c40_78 = arith.constant 40 : index
    %c0_79 = arith.constant 0 : index
    %82 = vector.load %arg7[%c40_78, %c0_79] : memref<80x256xf32, #tpu.memory_space<vmem>>, vector<8x256xf32>
    tpu.vector_store %arg7[%c40_78, %c0_79], %81 {strides = array<i32>} : memref<80x256xf32, #tpu.memory_space<vmem>>, vector<8x256xf32>,
    %c0_80 = arith.constant 0 : index
    %c143_81 = arith.constant 143 : index
    %83 = vector.load %arg6[%c0_80, %c143_81] : memref<8x512xf32, #tpu.memory_space<vmem>>, vector<8x256xf32>
    %c6_82 = arith.constant 6 : index
    %c0_83 = arith.constant 0 : index
    %84 = vector.load %arg4[%c6_82, %c0_83] : memref<9x256xf32, #tpu.memory_space<vmem>>, vector<1x256xf32>
    %85 = vector.broadcast %84 : vector<1x256xf32> to vector<8x256xf32>
    %86 = arith.mulf %83, %85 : vector<8x256xf32>
    %c48_84 = arith.constant 48 : index
    %c0_85 = arith.constant 0 : index
    %87 = vector.load %arg7[%c48_84, %c0_85] : memref<80x256xf32, #tpu.memory_space<vmem>>, vector<8x256xf32>
    tpu.vector_store %arg7[%c48_84, %c0_85], %86 {strides = array<i32>} : memref<80x256xf32, #tpu.memory_space<vmem>>, vector<8x256xf32>,
    %c0_86 = arith.constant 0 : index
    %c144_87 = arith.constant 144 : index
    %88 = vector.load %arg6[%c0_86, %c144_87] : memref<8x512xf32, #tpu.memory_space<vmem>>, vector<8x256xf32>
    %c7_88 = arith.constant 7 : index
    %c0_89 = arith.constant 0 : index
    %89 = vector.load %arg4[%c7_88, %c0_89] : memref<9x256xf32, #tpu.memory_space<vmem>>, vector<1x256xf32>
    %90 = vector.broadcast %89 : vector<1x256xf32> to vector<8x256xf32>
    %91 = arith.mulf %88, %90 : vector<8x256xf32>
    %c56_90 = arith.constant 56 : index
    %c0_91 = arith.constant 0 : index
    %92 = vector.load %arg7[%c56_90, %c0_91] : memref<80x256xf32, #tpu.memory_space<vmem>>, vector<8x256xf32>
    tpu.vector_store %arg7[%c56_90, %c0_91], %91 {strides = array<i32>} : memref<80x256xf32, #tpu.memory_space<vmem>>, vector<8x256xf32>,
    %c0_92 = arith.constant 0 : index
    %c145_93 = arith.constant 145 : index
    %93 = vector.load %arg6[%c0_92, %c145_93] : memref<8x512xf32, #tpu.memory_space<vmem>>, vector<8x256xf32>
    %c8_94 = arith.constant 8 : index
    %c0_95 = arith.constant 0 : index
    %94 = vector.load %arg4[%c8_94, %c0_95] : memref<9x256xf32, #tpu.memory_space<vmem>>, vector<1x256xf32>
    %95 = vector.broadcast %94 : vector<1x256xf32> to vector<8x256xf32>
    %96 = arith.mulf %93, %95 : vector<8x256xf32>
    %c64_96 = arith.constant 64 : index
    %c0_97 = arith.constant 0 : index
    %97 = vector.load %arg7[%c64_96, %c0_97] : memref<80x256xf32, #tpu.memory_space<vmem>>, vector<8x256xf32>
    tpu.vector_store %arg7[%c64_96, %c0_97], %96 {strides = array<i32>} : memref<80x256xf32, #tpu.memory_space<vmem>>, vector<8x256xf32>,
    %c0_98 = arith.constant 0 : index
    %c0_99 = arith.constant 0 : index
    %98 = vector.load %arg3[%c0_98, %c0_99] : memref<8x80xf32, #tpu.memory_space<vmem>>, vector<8x80xf32>
    %c0_100 = arith.constant 0 : index
    %c0_101 = arith.constant 0 : index
    %99 = vector.load %arg7[%c0_100, %c0_101] : memref<80x256xf32, #tpu.memory_space<vmem>>, vector<80x256xf32>
    %cst_102 = arith.constant dense<0.000000e+00> : vector<8x256xf32>
    %100 = tpu.matmul %98, %99, %cst_102 {dimension_numbers = #tpu.dot_dimension_numbers<[1], [0], [0], [1], [0, 0, 1, 1], [], []>} : vector<8x80xf32>, vector<80x256xf32>, vector<8x256xf32> -> vector<8x256xf32>
    %101 = arith.addf %100, %0 : vector<8x256xf32>
    %cst_103 = arith.constant 0.000000e+00 : f32
    %102 = vector.broadcast %cst_103 : f32 to vector<8x256xf32>
    %103 = arith.maximumf %101, %102 : vector<8x256xf32>
    %c0_104 = arith.constant 0 : index
    %c0_105 = arith.constant 0 : index
    %104 = vector.load %arg5[%c0_104, %c0_105] : memref<8x256xf32, #tpu.memory_space<vmem>>, vector<8x256xf32>
    tpu.vector_store %arg5[%c0_104, %c0_105], %103 {strides = array<i32>} : memref<8x256xf32, #tpu.memory_space<vmem>>, vector<8x256xf32>,
    return
  }
  func.func @transform_0(%arg0: i32) -> (i32, i32) {
    %c0_i32 = arith.constant 0 : i32
    %c0_i32_0 = arith.constant 0 : i32
    return %arg0, %c0_i32 : i32, i32
  }
  func.func @transform_1(%arg0: i32) -> (i32, i32) {
    %c0_i32 = arith.constant 0 : i32
    %c0_i32_0 = arith.constant 0 : i32
    %c0_i32_1 = arith.constant 0 : i32
    return %c0_i32, %c0_i32_0 : i32, i32
  }
  func.func @transform_2(%arg0: i32) -> (i32, i32) {
    %c0_i32 = arith.constant 0 : i32
    %c0_i32_0 = arith.constant 0 : i32
    %c0_i32_1 = arith.constant 0 : i32
    return %c0_i32, %c0_i32_0 : i32, i32
  }
  func.func @transform_3(%arg0: i32) -> (i32, i32) {
    %c0_i32 = arith.constant 0 : i32
    %c0_i32_0 = arith.constant 0 : i32
    %c0_i32_1 = arith.constant 0 : i32
    return %c0_i32, %c0_i32_0 : i32, i32
  }
  func.func @transform_4(%arg0: i32) -> (i32, i32) {
    %c0_i32 = arith.constant 0 : i32
    %c0_i32_0 = arith.constant 0 : i32
    return %arg0, %c0_i32 : i32, i32
  }
}

</mosaic_0001>

<llo_original>
// kernel: tpu_custom_call.1
$region0: #{tpu_custom_call.1}
  #allocation0 [shape = 'u32[]', space=smem, size = 0x4, offset = 0x4, fixed_abs, tag = 'smem constant byte address 0x4 - core index']
  #allocation1 [shape = 'u32[72,128]{1,0:T(1,128)}', space=vmem, size = 0x9000, scoped, tag = 'internal scratch']
  #allocation2 [shape = 'f32[8,512]{1,0:T(8,128)}', space=vmem, size = 0x4000, scoped, tag = 'scratch operand']
  #allocation3 [shape = 'f32[80,256]{1,0:T(8,128)}', space=vmem, size = 0x14000, scoped, tag = 'scratch operand']
  %s0 = inlined_call_operand.hbm [shape: f32[8,256], index: 0, kind: input, shape index: {}]
  %s1 = inlined_call_operand.hbm [shape: f32[8,80], index: 1, kind: input, shape index: {}]
  %s2 = inlined_call_operand.hbm [shape: f32[8,80], index: 2, kind: input, shape index: {}]
  %s3 = inlined_call_operand.hbm [shape: f32[9,256], index: 3, kind: input, shape index: {}]
  %s4 = inlined_call_operand.hbm [shape: f32[8,256], index: 4, kind: output, shape index: {}]
  %s5 = sld [smem:[#allocation0]]
  $region42: #{tpu_custom_call.1} parent=0
    _
  %s7 = ssub.s32 1, %s5
  %s8 = scalar_select 0, %s7, %s5
  $region1: #{tpu_custom_call.1} parent=0
    #allocation4 [shape = 'u8[8192]{0}', space=vmem, size = 0x2000, scoped, tag = 'input window, operand 0, single buffered']
    #allocation5 [shape = 's32[1]{0}', space=sflag, size = 0x4, scoped, tag = 'scoped memory for tpu_custom_call.1']
    #allocation6 [shape = 's32[1]{0}', space=sflag, size = 0x4, scoped, tag = 'scoped memory for tpu_custom_call.1']
    #allocation7 [shape = 'u8[4096]{0}', space=vmem, size = 0x1000, scoped, tag = 'input window, operand 1, single buffered']
    #allocation8 [shape = 's32[1]{0}', space=sflag, size = 0x4, scoped, tag = 'scoped memory for tpu_custom_call.1']
    #allocation9 [shape = 'u8[4096]{0}', space=vmem, size = 0x1000, scoped, tag = 'input window, operand 2, single buffered']
    #allocation10 [shape = 'u8[16384]{0}', space=vmem, size = 0x4000, scoped, tag = 'input window, operand 3, single buffered']
    #allocation11 [shape = 's32[1]{0}', space=sflag, size = 0x4, scoped, tag = 'scoped memory for tpu_custom_call.1']
    #allocation12 [shape = 'u8[8192]{0}', space=vmem, size = 0x2000, scoped, tag = 'output window, operand 0, single buffered']
    %9 = vsyncpa [#allocation5], 0
    %10 = vsyncpa [#allocation8], 0
    %11 = vsyncpa [#allocation11], 0
    %12 = vsyncpa [#allocation6], 0
    // Predicated region
    $region2: #{tpu_custom_call.1} parent=1 // pred_check
      _
    $region3: #{tpu_custom_call.1} parent=1 // pred_check_branch
      %14 = sbr.rel (0) target = $region5
    $region4: #{tpu_custom_call.1} parent=1 // pred_region
      %16 = vsyncadd [#allocation5], 0
      %s18 = sshll.u32 %s0, 4
      %s19 = int_to_ptr.hbm [resolvable:$true] %s18
      %s20 = sshll.u32 [#allocation4], 4
      %s21 = int_to_ptr.vmem [resolvable:$true] %s20
      %23 = dma.hbm_to_vmem [thread:$0]  %s19, 256, %s21, [#allocation5]
    $region5: #{tpu_custom_call.1} parent=1 // pred_fallthru
      _
    // Predicated region
    $region6: #{tpu_custom_call.1} parent=1 // pred_check
      _
    $region7: #{tpu_custom_call.1} parent=1 // pred_check_branch
      %25 = sbr.rel (0) target = $region9
    $region8: #{tpu_custom_call.1} parent=1 // pred_region
      %27 = vsyncadd [#allocation8], 0
      %s29 = sshll.u32 %s1, 4
      %s30 = int_to_ptr.hbm [resolvable:$true] %s29
      %s31 = sshll.u32 [#allocation7], 4
      %s32 = int_to_ptr.vmem [resolvable:$true] %s31
      %34 = dma.hbm_to_vmem [thread:$0]  %s30, 128, %s32, [#allocation8]
    $region9: #{tpu_custom_call.1} parent=1 // pred_fallthru
      _
    // Predicated region
    $region10: #{tpu_custom_call.1} parent=1 // pred_check
      _
    $region11: #{tpu_custom_call.1} parent=1 // pred_check_branch
      %36 = sbr.rel (0) target = $region13
    $region12: #{tpu_custom_call.1} parent=1 // pred_region
      %38 = vsyncadd [#allocation8], 0
      %s40 = sshll.u32 %s2, 4
      %s41 = int_to_ptr.hbm [resolvable:$true] %s40
      %s42 = sshll.u32 [#allocation9], 4
      %s43 = int_to_ptr.vmem [resolvable:$true] %s42
      %45 = dma.hbm_to_vmem [thread:$0]  %s41, 128, %s43, [#allocation8]
    $region13: #{tpu_custom_call.1} parent=1 // pred_fallthru
      _
    // Predicated region
    $region14: #{tpu_custom_call.1} parent=1 // pred_check
      _
    $region15: #{tpu_custom_call.1} parent=1 // pred_check_branch
      %47 = sbr.rel (0) target = $region17
    $region16: #{tpu_custom_call.1} parent=1 // pred_region
      %49 = vsyncadd [#allocation11], 0
      %s50 = sshll.u32 %s3, 4
      %s51 = int_to_ptr.hbm [resolvable:$true] %s50
      %s52 = sshll.u32 [#allocation10], 4
      %s53 = int_to_ptr.vmem [resolvable:$true] %s52
      %58 = dma.hbm_to_vmem [thread:$0]  %s51, 512, %s53, [#allocation11], 256, 256, 16
    $region17: #{tpu_custom_call.1} parent=1 // pred_fallthru
      _
    // Predicated region
    $region18: #{tpu_custom_call.1} parent=1 // pred_check
      _
    $region19: #{tpu_custom_call.1} parent=1 // pred_check_branch
      %60 = sbr.rel (0) target = $region21
    $region20: #{tpu_custom_call.1} parent=1 // pred_region
      %62 = dma.done [#allocation5], 256
    $region21: #{tpu_custom_call.1} parent=1 // pred_fallthru
      _
    // Predicated region
    $region22: #{tpu_custom_call.1} parent=1 // pred_check
      _
    $region23: #{tpu_custom_call.1} parent=1 // pred_check_branch
      %64 = sbr.rel (0) target = $region25
    $region24: #{tpu_custom_call.1} parent=1 // pred_region
      %66 = dma.done [#allocation8], 128
    $region25: #{tpu_custom_call.1} parent=1 // pred_fallthru
      _
    // Predicated region
    $region26: #{tpu_custom_call.1} parent=1 // pred_check
      _
    $region27: #{tpu_custom_call.1} parent=1 // pred_check_branch
      %68 = sbr.rel (0) target = $region29
    $region28: #{tpu_custom_call.1} parent=1 // pred_region
      %70 = dma.done [#allocation8], 128
    $region29: #{tpu_custom_call.1} parent=1 // pred_fallthru
      _
    // Predicated region
    $region30: #{tpu_custom_call.1} parent=1 // pred_check
      _
    $region31: #{tpu_custom_call.1} parent=1 // pred_check_branch
      %72 = sbr.rel (0) target = $region33
    $region32: #{tpu_custom_call.1} parent=1 // pred_region
      %74 = dma.done [#allocation11], 512
    $region33: #{tpu_custom_call.1} parent=1 // pred_fallthru
      _
    %v75 = vld [vmem:[#allocation4] sm:$0xff]
    %v76 = vld [vmem:[#allocation4 + $0x8] sm:$0xff]
    %vm77 = vcmask 1048440
    %78 = vst.msk [vmem:[#allocation2] sm:$0xff] %vm77, 0.0
    %vm79 = vcmask 138240
    %80 = vst.msk [vmem:[#allocation2 + $0x18] sm:$0xff] %vm79, 0.0
    %81 = vst [vmem:[#allocation3 + $0x90] sm:$0xff] 1.0
    %82 = vst [vmem:[#allocation3 + $0x98] sm:$0xff] 1.0
    %83 = vst [vmem:[#allocation2 + $0x8] sm:$0xff] %v75
    %84 = vst [vmem:[#allocation2 + $0x10] sm:$0xff] %v76
    %v85 = vld [vmem:[#allocation2] sm:$0xff]
    %v86 = vld [vmem:[#allocation2 + $0x8] sm:$0xff]
    %v87 = vld [vmem:[#allocation2 + $0x10] sm:$0xff]
    %v88 = vld [vmem:[#allocation10] ss:$8 sm:$0x3]
    %v90 = vperm.slane %v88, 0
    %v91 = vperm.slane %v88, 1
    %92 = vrot.lane.b32.xlu0 %v90, 111
    %v93 = vpop.permute.xlu0 %92
    %94 = vrot.lane.b32.xlu0 %v91, 111
    %v95 = vpop.permute.xlu0 %94
    %vm96 = vcmask 908288
    %v97 = vsel %vm96, %v93, %v95
    %v101 = vmul.f32 %v85, %v93
    %v102 = vmul.f32 %v86, %v97
    %v103 = vmul.f32 %v87, %v95
    %107 = vrot.lane.b32.xlu0 %v101, 17
    %v108 = vpop.permute.xlu0 %107
    %109 = vrot.lane.b32.xlu0 %v102, 17
    %v110 = vpop.permute.xlu0 %109
    %111 = vrot.lane.b32.xlu0 %v103, 17
    %v112 = vpop.permute.xlu0 %111
    %v113 = vsel %vm79, %v108, %v110
    %v114 = vsel %vm79, %v110, %v112
    %117 = vst [vmem:[#allocation3] sm:$0xff] %v113
    %118 = vst [vmem:[#allocation3 + $0x8] sm:$0xff] %v114
    %v119 = vld [vmem:[#allocation2] sm:$0xff]
    %v120 = vld [vmem:[#allocation2 + $0x8] sm:$0xff]
    %v121 = vld [vmem:[#allocation2 + $0x10] sm:$0xff]
    %s122 = scalar_lea.vmem [#allocation10], 1
    %v123 = vld [vmem:[%s122] ss:$8 sm:$0x3]
    %v125 = vperm.slane %v123, 0
    %v126 = vperm.slane %v123, 1
    %127 = vrot.lane.b32.xlu0 %v125, 112
    %v128 = vpop.permute.xlu0 %127
    %129 = vrot.lane.b32.xlu0 %v126, 112
    %v130 = vpop.permute.xlu0 %129
    %vm131 = vcmask 916480
    %v132 = vsel %vm131, %v128, %v130
    %v136 = vmul.f32 %v119, %v128
    %v137 = vmul.f32 %v120, %v132
    %v138 = vmul.f32 %v121, %v130
    %142 = vrot.lane.b32.xlu0 %v136, 16
    %v143 = vpop.permute.xlu0 %142
    %144 = vrot.lane.b32.xlu0 %v137, 16
    %v145 = vpop.permute.xlu0 %144
    %146 = vrot.lane.b32.xlu0 %v138, 16
    %v147 = vpop.permute.xlu0 %146
    %vm148 = vcmask 130048
    %v149 = vsel %vm148, %v143, %v145
    %v150 = vsel %vm148, %v145, %v147
    %153 = vst [vmem:[#allocation3 + $0x10] sm:$0xff] %v149
    %154 = vst [vmem:[#allocation3 + $0x18] sm:$0xff] %v150
    %v155 = vld [vmem:[#allocation2] sm:$0xff]
    %v156 = vld [vmem:[#allocation2 + $0x8] sm:$0xff]
    %v157 = vld [vmem:[#allocation2 + $0x10] sm:$0xff]
    %s158 = scalar_lea.vmem [#allocation10], 2
    %v159 = vld [vmem:[%s158] ss:$8 sm:$0x3]
    %v161 = vperm.slane %v159, 0
    %v162 = vperm.slane %v159, 1
    %163 = vrot.lane.b32.xlu0 %v161, 113
    %v164 = vpop.permute.xlu0 %163
    %165 = vrot.lane.b32.xlu0 %v162, 113
    %v166 = vpop.permute.xlu0 %165
    %vm167 = vcmask 924672
    %v168 = vsel %vm167, %v164, %v166
    %v172 = vmul.f32 %v155, %v164
    %v173 = vmul.f32 %v156, %v168
    %v174 = vmul.f32 %v157, %v166
    %178 = vrot.lane.b32.xlu0 %v172, 15
    %v179 = vpop.permute.xlu0 %178
    %180 = vrot.lane.b32.xlu0 %v173, 15
    %v181 = vpop.permute.xlu0 %180
    %182 = vrot.lane.b32.xlu0 %v174, 15
    %v183 = vpop.permute.xlu0 %182
    %vm184 = vcmask 121856
    %v185 = vsel %vm184, %v179, %v181
    %v186 = vsel %vm184, %v181, %v183
    %189 = vst [vmem:[#allocation3 + $0x20] sm:$0xff] %v185
    %190 = vst [vmem:[#allocation3 + $0x28] sm:$0xff] %v186
    %v191 = vld [vmem:[#allocation2] sm:$0xff]
    %v192 = vld [vmem:[#allocation2 + $0x8] sm:$0xff]
    %v193 = vld [vmem:[#allocation2 + $0x10] sm:$0xff]
    %s194 = scalar_lea.vmem [#allocation10], 3
    %v195 = vld [vmem:[%s194] ss:$8 sm:$0x3]
    %v197 = vperm.slane %v195, 0
    %v198 = vperm.slane %v195, 1
    %199 = vrot.lane.b32.xlu0 %v197, 127
    %v200 = vpop.permute.xlu0 %199
    %201 = vrot.lane.b32.xlu0 %v198, 127
    %v202 = vpop.permute.xlu0 %201
    %vm203 = vcmask 1039360
    %v204 = vsel %vm203, %v200, %v202
    %v208 = vmul.f32 %v191, %v200
    %v209 = vmul.f32 %v192, %v204
    %v210 = vmul.f32 %v193, %v202
    %214 = vrot.lane.b32.xlu0 %v208, 1
    %v215 = vpop.permute.xlu0 %214
    %216 = vrot.lane.b32.xlu0 %v209, 1
    %v217 = vpop.permute.xlu0 %216
    %218 = vrot.lane.b32.xlu0 %v210, 1
    %v219 = vpop.permute.xlu0 %218
    %vm220 = vcmask 7168
    %v221 = vsel %vm220, %v215, %v217
    %v222 = vsel %vm220, %v217, %v219
    %225 = vst [vmem:[#allocation3 + $0x30] sm:$0xff] %v221
    %226 = vst [vmem:[#allocation3 + $0x38] sm:$0xff] %v222
    %v227 = vld [vmem:[#allocation2 + $0x8] sm:$0xff]
    %v228 = vld [vmem:[#allocation2 + $0x10] sm:$0xff]
    %229 = vst [vmem:[#allocation3 + $0x40] sm:$0xff] %v227
    %230 = vst [vmem:[#allocation3 + $0x48] sm:$0xff] %v228
    %v231 = vld [vmem:[#allocation2 + $0x8] sm:$0xff]
    %v232 = vld [vmem:[#allocation2 + $0x10] sm:$0xff]
    %v233 = vld [vmem:[#allocation2 + $0x18] sm:$0xff]
    %s234 = scalar_lea.vmem [#allocation10], 5
    %v235 = vld [vmem:[%s234] ss:$8 sm:$0x3]
    %v237 = vperm.slane %v235, 0
    %v238 = vperm.slane %v235, 1
    %239 = vrot.lane.b32.xlu0 %v237, 1
    %v240 = vpop.permute.xlu0 %239
    %241 = vrot.lane.b32.xlu0 %v238, 1
    %v242 = vpop.permute.xlu0 %241
    %v243 = vsel %vm220, %v240, %v242
    %v247 = vmul.f32 %v231, %v240
    %v248 = vmul.f32 %v232, %v243
    %v249 = vmul.f32 %v233, %v242
    %253 = vrot.lane.b32.xlu0 %v247, 127
    %v254 = vpop.permute.xlu0 %253
    %255 = vrot.lane.b32.xlu0 %v248, 127
    %v256 = vpop.permute.xlu0 %255
    %257 = vrot.lane.b32.xlu0 %v249, 127
    %v258 = vpop.permute.xlu0 %257
    %v259 = vsel %vm203, %v254, %v256
    %v260 = vsel %vm203, %v256, %v258
    %263 = vst [vmem:[#allocation3 + $0x50] sm:$0xff] %v259
    %264 = vst [vmem:[#allocation3 + $0x58] sm:$0xff] %v260
    %v265 = vld [vmem:[#allocation2 + $0x8] sm:$0xff]
    %v266 = vld [vmem:[#allocation2 + $0x10] sm:$0xff]
    %v267 = vld [vmem:[#allocation2 + $0x18] sm:$0xff]
    %s268 = scalar_lea.vmem [#allocation10], 6
    %v269 = vld [vmem:[%s268] ss:$8 sm:$0x3]
    %v271 = vperm.slane %v269, 0
    %v272 = vperm.slane %v269, 1
    %273 = vrot.lane.b32.xlu0 %v271, 15
    %v274 = vpop.permute.xlu0 %273
    %275 = vrot.lane.b32.xlu0 %v272, 15
    %v276 = vpop.permute.xlu0 %275
    %v277 = vsel %vm184, %v274, %v276
    %v281 = vmul.f32 %v265, %v274
    %v282 = vmul.f32 %v266, %v277
    %v283 = vmul.f32 %v267, %v276
    %287 = vrot.lane.b32.xlu0 %v281, 113
    %v288 = vpop.permute.xlu0 %287
    %289 = vrot.lane.b32.xlu0 %v282, 113
    %v290 = vpop.permute.xlu0 %289
    %291 = vrot.lane.b32.xlu0 %v283, 113
    %v292 = vpop.permute.xlu0 %291
    %v293 = vsel %vm167, %v288, %v290
    %v294 = vsel %vm167, %v290, %v292
    %297 = vst [vmem:[#allocation3 + $0x60] sm:$0xff] %v293
    %298 = vst [vmem:[#allocation3 + $0x68] sm:$0xff] %v294
    %v299 = vld [vmem:[#allocation2 + $0x8] sm:$0xff]
    %v300 = vld [vmem:[#allocation2 + $0x10] sm:$0xff]
    %v301 = vld [vmem:[#allocation2 + $0x18] sm:$0xff]
    %s302 = scalar_lea.vmem [#allocation10], 7
    %v303 = vld [vmem:[%s302] ss:$8 sm:$0x3]
    %v305 = vperm.slane %v303, 0
    %v306 = vperm.slane %v303, 1
    %307 = vrot.lane.b32.xlu0 %v305, 16
    %v308 = vpop.permute.xlu0 %307
    %309 = vrot.lane.b32.xlu0 %v306, 16
    %v310 = vpop.permute.xlu0 %309
    %v311 = vsel %vm148, %v308, %v310
    %v315 = vmul.f32 %v299, %v308
    %v316 = vmul.f32 %v300, %v311
    %v317 = vmul.f32 %v301, %v310
    %321 = vrot.lane.b32.xlu0 %v315, 112
    %v322 = vpop.permute.xlu0 %321
    %323 = vrot.lane.b32.xlu0 %v316, 112
    %v324 = vpop.permute.xlu0 %323
    %325 = vrot.lane.b32.xlu0 %v317, 112
    %v326 = vpop.permute.xlu0 %325
    %v327 = vsel %vm131, %v322, %v324
    %v328 = vsel %vm131, %v324, %v326
    %331 = vst [vmem:[#allocation3 + $0x70] sm:$0xff] %v327
    %332 = vst [vmem:[#allocation3 + $0x78] sm:$0xff] %v328
    %v333 = vld [vmem:[#allocation2 + $0x8] sm:$0xff]
    %v334 = vld [vmem:[#allocation2 + $0x10] sm:$0xff]
    %v335 = vld [vmem:[#allocation2 + $0x18] sm:$0xff]
    %s336 = scalar_lea.vmem [#allocation10], 16
    %v337 = vld [vmem:[%s336] ss:$8 sm:$0x3]
    %v339 = vperm.slane %v337, 0
    %v340 = vperm.slane %v337, 1
    %341 = vrot.lane.b32.xlu0 %v339, 17
    %v342 = vpop.permute.xlu0 %341
    %343 = vrot.lane.b32.xlu0 %v340, 17
    %v344 = vpop.permute.xlu0 %343
    %v345 = vsel %vm79, %v342, %v344
    %v349 = vmul.f32 %v333, %v342
    %v350 = vmul.f32 %v334, %v345
    %v351 = vmul.f32 %v335, %v344
    %355 = vrot.lane.b32.xlu0 %v349, 111
    %v356 = vpop.permute.xlu0 %355
    %357 = vrot.lane.b32.xlu0 %v350, 111
    %v358 = vpop.permute.xlu0 %357
    %359 = vrot.lane.b32.xlu0 %v351, 111
    %v360 = vpop.permute.xlu0 %359
    %v361 = vsel %vm96, %v356, %v358
    %v362 = vsel %vm96, %v358, %v360
    %365 = vst [vmem:[#allocation3 + $0x80] sm:$0xff] %v361
    %366 = vst [vmem:[#allocation3 + $0x88] sm:$0xff] %v362
    %v367 = vld [vmem:[#allocation7] sm:$0xff]
    %v368 = vld [vmem:[#allocation3] sm:$0xff]
    %v369 = vld [vmem:[#allocation3 + $0x8] sm:$0xff]
    %v370 = vld [vmem:[#allocation3 + $0x10] sm:$0xff]
    %v371 = vld [vmem:[#allocation3 + $0x18] sm:$0xff]
    %v372 = vld [vmem:[#allocation3 + $0x20] sm:$0xff]
    %v373 = vld [vmem:[#allocation3 + $0x28] sm:$0xff]
    %v374 = vld [vmem:[#allocation3 + $0x30] sm:$0xff]
    %v375 = vld [vmem:[#allocation3 + $0x38] sm:$0xff]
    %v376 = vld [vmem:[#allocation3 + $0x40] sm:$0xff]
    %v377 = vld [vmem:[#allocation3 + $0x48] sm:$0xff]
    %v378 = vld [vmem:[#allocation3 + $0x50] sm:$0xff]
    %v379 = vld [vmem:[#allocation3 + $0x58] sm:$0xff]
    %v380 = vld [vmem:[#allocation3 + $0x60] sm:$0xff]
    %v381 = vld [vmem:[#allocation3 + $0x68] sm:$0xff]
    %v382 = vld [vmem:[#allocation3 + $0x70] sm:$0xff]
    %v383 = vld [vmem:[#allocation3 + $0x78] sm:$0xff]
    %v384 = vld [vmem:[#allocation3 + $0x80] sm:$0xff]
    %v385 = vld [vmem:[#allocation3 + $0x88] sm:$0xff]
    %v386 = vld [vmem:[#allocation3 + $0x90] sm:$0xff]
    %v387 = vld [vmem:[#allocation3 + $0x98] sm:$0xff]
    %vm388 = vcmask 654336
    %v390 = vsel %vm388, %v367, 0
    %392 = vmatpush.msra.mxu0 0.0
    %393 = vmatpush.msra.mxu0 0.0
    %394 = vmatpush.msra.mxu0 0.0
    %395 = vmatpush.msra.mxu0 0.0
    %396 = vmatpush.msra.mxu0 0.0
    %397 = vmatpush.msra.mxu0 0.0
    %398 = vmatpush.msra.mxu0 %v386
    %399 = vmatpush.msra.mxu0 %v384
    %400 = vmatpush.msra.mxu0 %v382
    %401 = vmatpush.msra.mxu0 %v380
    %402 = vmatpush.msra.mxu0 %v378
    %403 = vmatpush.msra.mxu0 %v376
    %404 = vmatpush.msra.mxu0 %v374
    %405 = vmatpush.msra.mxu0 %v372
    %406 = vmatpush.msra.mxu0 %v370
    %407 = vmatpush.msra.mxu0 %v368
    %408 = vmatmul.f32.gmra.mxu0 %v390
    %v409 = vpop.f32.mrf.mxu0
    %v410 = vadd.f32 0.0, %v409
    %411 = vdwg.mxu0
    %412 = vmatpush.msra.mxu0 0.0
    %413 = vmatpush.msra.mxu0 0.0
    %414 = vmatpush.msra.mxu0 0.0
    %415 = vmatpush.msra.mxu0 0.0
    %416 = vmatpush.msra.mxu0 0.0
    %417 = vmatpush.msra.mxu0 0.0
    %418 = vmatpush.msra.mxu0 %v387
    %419 = vmatpush.msra.mxu0 %v385
    %420 = vmatpush.msra.mxu0 %v383
    %421 = vmatpush.msra.mxu0 %v381
    %422 = vmatpush.msra.mxu0 %v379
    %423 = vmatpush.msra.mxu0 %v377
    %424 = vmatpush.msra.mxu0 %v375
    %425 = vmatpush.msra.mxu0 %v373
    %426 = vmatpush.msra.mxu0 %v371
    %427 = vmatpush.msra.mxu0 %v369
    %428 = vmatmul.f32.gmra.mxu0 %v390
    %v429 = vpop.f32.mrf.mxu0
    %v430 = vadd.f32 0.0, %v429
    %431 = vdwg.mxu0
    %v432 = vmax.f32 %v410, 0.0
    %v433 = vmax.f32 %v430, 0.0
    %434 = vst [vmem:[#allocation2 + $0x8] sm:$0xff] %v432
    %435 = vst [vmem:[#allocation2 + $0x10] sm:$0xff] %v433
    %v436 = vld [vmem:[#allocation2] sm:$0xff]
    %v437 = vld [vmem:[#allocation2 + $0x8] sm:$0xff]
    %v438 = vld [vmem:[#allocation2 + $0x10] sm:$0xff]
    %v439 = vld [vmem:[#allocation10] ss:$8 sm:$0x3]
    %v441 = vperm.slane %v439, 0
    %v442 = vperm.slane %v439, 1
    %443 = vrot.lane.b32.xlu0 %v441, 111
    %v444 = vpop.permute.xlu0 %443
    %445 = vrot.lane.b32.xlu0 %v442, 111
    %v446 = vpop.permute.xlu0 %445
    %v447 = vsel %vm96, %v444, %v446
    %v451 = vmul.f32 %v436, %v444
    %v452 = vmul.f32 %v437, %v447
    %v453 = vmul.f32 %v438, %v446
    %457 = vrot.lane.b32.xlu0 %v451, 17
    %v458 = vpop.permute.xlu0 %457
    %459 = vrot.lane.b32.xlu0 %v452, 17
    %v460 = vpop.permute.xlu0 %459
    %461 = vrot.lane.b32.xlu0 %v453, 17
    %v462 = vpop.permute.xlu0 %461
    %v463 = vsel %vm79, %v458, %v460
    %v464 = vsel %vm79, %v460, %v462
    %467 = vst [vmem:[#allocation3] sm:$0xff] %v463
    %468 = vst [vmem:[#allocation3 + $0x8] sm:$0xff] %v464
    %v469 = vld [vmem:[#allocation2] sm:$0xff]
    %v470 = vld [vmem:[#allocation2 + $0x8] sm:$0xff]
    %v471 = vld [vmem:[#allocation2 + $0x10] sm:$0xff]
    %v472 = vld [vmem:[%s122] ss:$8 sm:$0x3]
    %v474 = vperm.slane %v472, 0
    %v475 = vperm.slane %v472, 1
    %476 = vrot.lane.b32.xlu0 %v474, 112
    %v477 = vpop.permute.xlu0 %476
    %478 = vrot.lane.b32.xlu0 %v475, 112
    %v479 = vpop.permute.xlu0 %478
    %v480 = vsel %vm131, %v477, %v479
    %v484 = vmul.f32 %v469, %v477
    %v485 = vmul.f32 %v470, %v480
    %v486 = vmul.f32 %v471, %v479
    %490 = vrot.lane.b32.xlu0 %v484, 16
    %v491 = vpop.permute.xlu0 %490
    %492 = vrot.lane.b32.xlu0 %v485, 16
    %v493 = vpop.permute.xlu0 %492
    %494 = vrot.lane.b32.xlu0 %v486, 16
    %v495 = vpop.permute.xlu0 %494
    %v496 = vsel %vm148, %v491, %v493
    %v497 = vsel %vm148, %v493, %v495
    %500 = vst [vmem:[#allocation3 + $0x10] sm:$0xff] %v496
    %501 = vst [vmem:[#allocation3 + $0x18] sm:$0xff] %v497
    %v502 = vld [vmem:[#allocation2] sm:$0xff]
    %v503 = vld [vmem:[#allocation2 + $0x8] sm:$0xff]
    %v504 = vld [vmem:[#allocation2 + $0x10] sm:$0xff]
    %v505 = vld [vmem:[%s158] ss:$8 sm:$0x3]
    %v507 = vperm.slane %v505, 0
    %v508 = vperm.slane %v505, 1
    %509 = vrot.lane.b32.xlu0 %v507, 113
    %v510 = vpop.permute.xlu0 %509
    %511 = vrot.lane.b32.xlu0 %v508, 113
    %v512 = vpop.permute.xlu0 %511
    %v513 = vsel %vm167, %v510, %v512
    %v517 = vmul.f32 %v502, %v510
    %v518 = vmul.f32 %v503, %v513
    %v519 = vmul.f32 %v504, %v512
    %523 = vrot.lane.b32.xlu0 %v517, 15
    %v524 = vpop.permute.xlu0 %523
    %525 = vrot.lane.b32.xlu0 %v518, 15
    %v526 = vpop.permute.xlu0 %525
    %527 = vrot.lane.b32.xlu0 %v519, 15
    %v528 = vpop.permute.xlu0 %527
    %v529 = vsel %vm184, %v524, %v526
    %v530 = vsel %vm184, %v526, %v528
    %533 = vst [vmem:[#allocation3 + $0x20] sm:$0xff] %v529
    %534 = vst [vmem:[#allocation3 + $0x28] sm:$0xff] %v530
    %v535 = vld [vmem:[#allocation2] sm:$0xff]
    %v536 = vld [vmem:[#allocation2 + $0x8] sm:$0xff]
    %v537 = vld [vmem:[#allocation2 + $0x10] sm:$0xff]
    %v538 = vld [vmem:[%s194] ss:$8 sm:$0x3]
    %v540 = vperm.slane %v538, 0
    %v541 = vperm.slane %v538, 1
    %542 = vrot.lane.b32.xlu0 %v540, 127
    %v543 = vpop.permute.xlu0 %542
    %544 = vrot.lane.b32.xlu0 %v541, 127
    %v545 = vpop.permute.xlu0 %544
    %v546 = vsel %vm203, %v543, %v545
    %v550 = vmul.f32 %v535, %v543
    %v551 = vmul.f32 %v536, %v546
    %v552 = vmul.f32 %v537, %v545
    %556 = vrot.lane.b32.xlu0 %v550, 1
    %v557 = vpop.permute.xlu0 %556
    %558 = vrot.lane.b32.xlu0 %v551, 1
    %v559 = vpop.permute.xlu0 %558
    %560 = vrot.lane.b32.xlu0 %v552, 1
    %v561 = vpop.permute.xlu0 %560
    %v562 = vsel %vm220, %v557, %v559
    %v563 = vsel %vm220, %v559, %v561
    %566 = vst [vmem:[#allocation3 + $0x30] sm:$0xff] %v562
    %567 = vst [vmem:[#allocation3 + $0x38] sm:$0xff] %v563
    %v568 = vld [vmem:[#allocation2 + $0x8] sm:$0xff]
    %v569 = vld [vmem:[#allocation2 + $0x10] sm:$0xff]
    %570 = vst [vmem:[#allocation3 + $0x40] sm:$0xff] %v568
    %571 = vst [vmem:[#allocation3 + $0x48] sm:$0xff] %v569
    %v572 = vld [vmem:[#allocation2 + $0x8] sm:$0xff]
    %v573 = vld [vmem:[#allocation2 + $0x10] sm:$0xff]
    %v574 = vld [vmem:[#allocation2 + $0x18] sm:$0xff]
    %v575 = vld [vmem:[%s234] ss:$8 sm:$0x3]
    %v577 = vperm.slane %v575, 0
    %v578 = vperm.slane %v575, 1
    %579 = vrot.lane.b32.xlu0 %v577, 1
    %v580 = vpop.permute.xlu0 %579
    %581 = vrot.lane.b32.xlu0 %v578, 1
    %v582 = vpop.permute.xlu0 %581
    %v583 = vsel %vm220, %v580, %v582
    %v587 = vmul.f32 %v572, %v580
    %v588 = vmul.f32 %v573, %v583
    %v589 = vmul.f32 %v574, %v582
    %593 = vrot.lane.b32.xlu0 %v587, 127
    %v594 = vpop.permute.xlu0 %593
    %595 = vrot.lane.b32.xlu0 %v588, 127
    %v596 = vpop.permute.xlu0 %595
    %597 = vrot.lane.b32.xlu0 %v589, 127
    %v598 = vpop.permute.xlu0 %597
    %v599 = vsel %vm203, %v594, %v596
    %v600 = vsel %vm203, %v596, %v598
    %603 = vst [vmem:[#allocation3 + $0x50] sm:$0xff] %v599
    %604 = vst [vmem:[#allocation3 + $0x58] sm:$0xff] %v600
    %v605 = vld [vmem:[#allocation2 + $0x8] sm:$0xff]
    %v606 = vld [vmem:[#allocation2 + $0x10] sm:$0xff]
    %v607 = vld [vmem:[#allocation2 + $0x18] sm:$0xff]
    %v608 = vld [vmem:[%s268] ss:$8 sm:$0x3]
    %v610 = vperm.slane %v608, 0
    %v611 = vperm.slane %v608, 1
    %612 = vrot.lane.b32.xlu0 %v610, 15
    %v613 = vpop.permute.xlu0 %612
    %614 = vrot.lane.b32.xlu0 %v611, 15
    %v615 = vpop.permute.xlu0 %614
    %v616 = vsel %vm184, %v613, %v615
    %v620 = vmul.f32 %v605, %v613
    %v621 = vmul.f32 %v606, %v616
    %v622 = vmul.f32 %v607, %v615
    %626 = vrot.lane.b32.xlu0 %v620, 113
    %v627 = vpop.permute.xlu0 %626
    %628 = vrot.lane.b32.xlu0 %v621, 113
    %v629 = vpop.permute.xlu0 %628
    %630 = vrot.lane.b32.xlu0 %v622, 113
    %v631 = vpop.permute.xlu0 %630
    %v632 = vsel %vm167, %v627, %v629
    %v633 = vsel %vm167, %v629, %v631
    %636 = vst [vmem:[#allocation3 + $0x60] sm:$0xff] %v632
    %637 = vst [vmem:[#allocation3 + $0x68] sm:$0xff] %v633
    %v638 = vld [vmem:[#allocation2 + $0x8] sm:$0xff]
    %v639 = vld [vmem:[#allocation2 + $0x10] sm:$0xff]
    %v640 = vld [vmem:[#allocation2 + $0x18] sm:$0xff]
    %v641 = vld [vmem:[%s302] ss:$8 sm:$0x3]
    %v643 = vperm.slane %v641, 0
    %v644 = vperm.slane %v641, 1
    %645 = vrot.lane.b32.xlu0 %v643, 16
    %v646 = vpop.permute.xlu0 %645
    %647 = vrot.lane.b32.xlu0 %v644, 16
    %v648 = vpop.permute.xlu0 %647
    %v649 = vsel %vm148, %v646, %v648
    %v653 = vmul.f32 %v638, %v646
    %v654 = vmul.f32 %v639, %v649
    %v655 = vmul.f32 %v640, %v648
    %659 = vrot.lane.b32.xlu0 %v653, 112
    %v660 = vpop.permute.xlu0 %659
    %661 = vrot.lane.b32.xlu0 %v654, 112
    %v662 = vpop.permute.xlu0 %661
    %663 = vrot.lane.b32.xlu0 %v655, 112
    %v664 = vpop.permute.xlu0 %663
    %v665 = vsel %vm131, %v660, %v662
    %v666 = vsel %vm131, %v662, %v664
    %669 = vst [vmem:[#allocation3 + $0x70] sm:$0xff] %v665
    %670 = vst [vmem:[#allocation3 + $0x78] sm:$0xff] %v666
    %v671 = vld [vmem:[#allocation2 + $0x8] sm:$0xff]
    %v672 = vld [vmem:[#allocation2 + $0x10] sm:$0xff]
    %v673 = vld [vmem:[#allocation2 + $0x18] sm:$0xff]
    %v674 = vld [vmem:[%s336] ss:$8 sm:$0x3]
    %v676 = vperm.slane %v674, 0
    %v677 = vperm.slane %v674, 1
    %678 = vrot.lane.b32.xlu0 %v676, 17
    %v679 = vpop.permute.xlu0 %678
    %680 = vrot.lane.b32.xlu0 %v677, 17
    %v681 = vpop.permute.xlu0 %680
    %v682 = vsel %vm79, %v679, %v681
    %v686 = vmul.f32 %v671, %v679
    %v687 = vmul.f32 %v672, %v682
    %v688 = vmul.f32 %v673, %v681
    %692 = vrot.lane.b32.xlu0 %v686, 111
    %v693 = vpop.permute.xlu0 %692
    %694 = vrot.lane.b32.xlu0 %v687, 111
    %v695 = vpop.permute.xlu0 %694
    %696 = vrot.lane.b32.xlu0 %v688, 111
    %v697 = vpop.permute.xlu0 %696
    %v698 = vsel %vm96, %v693, %v695
    %v699 = vsel %vm96, %v695, %v697
    %702 = vst [vmem:[#allocation3 + $0x80] sm:$0xff] %v698
    %703 = vst [vmem:[#allocation3 + $0x88] sm:$0xff] %v699
    %v704 = vld [vmem:[#allocation9] sm:$0xff]
    %v705 = vld [vmem:[#allocation3] sm:$0xff]
    %v706 = vld [vmem:[#allocation3 + $0x8] sm:$0xff]
    %v707 = vld [vmem:[#allocation3 + $0x10] sm:$0xff]
    %v708 = vld [vmem:[#allocation3 + $0x18] sm:$0xff]
    %v709 = vld [vmem:[#allocation3 + $0x20] sm:$0xff]
    %v710 = vld [vmem:[#allocation3 + $0x28] sm:$0xff]
    %v711 = vld [vmem:[#allocation3 + $0x30] sm:$0xff]
    %v712 = vld [vmem:[#allocation3 + $0x38] sm:$0xff]
    %v713 = vld [vmem:[#allocation3 + $0x40] sm:$0xff]
    %v714 = vld [vmem:[#allocation3 + $0x48] sm:$0xff]
    %v715 = vld [vmem:[#allocation3 + $0x50] sm:$0xff]
    %v716 = vld [vmem:[#allocation3 + $0x58] sm:$0xff]
    %v717 = vld [vmem:[#allocation3 + $0x60] sm:$0xff]
    %v718 = vld [vmem:[#allocation3 + $0x68] sm:$0xff]
    %v719 = vld [vmem:[#allocation3 + $0x70] sm:$0xff]
    %v720 = vld [vmem:[#allocation3 + $0x78] sm:$0xff]
    %v721 = vld [vmem:[#allocation3 + $0x80] sm:$0xff]
    %v722 = vld [vmem:[#allocation3 + $0x88] sm:$0xff]
    %v723 = vld [vmem:[#allocation3 + $0x90] sm:$0xff]
    %v724 = vld [vmem:[#allocation3 + $0x98] sm:$0xff]
    %v726 = vsel %vm388, %v704, 0
    %728 = vmatpush.msra.mxu0 0.0
    %729 = vmatpush.msra.mxu0 0.0
    %730 = vmatpush.msra.mxu0 0.0
    %731 = vmatpush.msra.mxu0 0.0
    %732 = vmatpush.msra.mxu0 0.0
    %733 = vmatpush.msra.mxu0 0.0
    %734 = vmatpush.msra.mxu0 %v723
    %735 = vmatpush.msra.mxu0 %v721
    %736 = vmatpush.msra.mxu0 %v719
    %737 = vmatpush.msra.mxu0 %v717
    %738 = vmatpush.msra.mxu0 %v715
    %739 = vmatpush.msra.mxu0 %v713
    %740 = vmatpush.msra.mxu0 %v711
    %741 = vmatpush.msra.mxu0 %v709
    %742 = vmatpush.msra.mxu0 %v707
    %743 = vmatpush.msra.mxu0 %v705
    %744 = vmatmul.f32.gmra.mxu0 %v726
    %v745 = vpop.f32.mrf.mxu0
    %v746 = vadd.f32 %v75, %v745
    %747 = vdwg.mxu0
    %748 = vmatpush.msra.mxu0 0.0
    %749 = vmatpush.msra.mxu0 0.0
    %750 = vmatpush.msra.mxu0 0.0
    %751 = vmatpush.msra.mxu0 0.0
    %752 = vmatpush.msra.mxu0 0.0
    %753 = vmatpush.msra.mxu0 0.0
    %754 = vmatpush.msra.mxu0 %v724
    %755 = vmatpush.msra.mxu0 %v722
    %756 = vmatpush.msra.mxu0 %v720
    %757 = vmatpush.msra.mxu0 %v718
    %758 = vmatpush.msra.mxu0 %v716
    %759 = vmatpush.msra.mxu0 %v714
    %760 = vmatpush.msra.mxu0 %v712
    %761 = vmatpush.msra.mxu0 %v710
    %762 = vmatpush.msra.mxu0 %v708
    %763 = vmatpush.msra.mxu0 %v706
    %764 = vmatmul.f32.gmra.mxu0 %v726
    %v765 = vpop.f32.mrf.mxu0
    %v766 = vadd.f32 %v76, %v765
    %767 = vdwg.mxu0
    %v768 = vmax.f32 %v746, 0.0
    %v769 = vmax.f32 %v766, 0.0
    %770 = vst [vmem:[#allocation12] sm:$0xff] %v768
    %771 = vst [vmem:[#allocation12 + $0x8] sm:$0xff] %v769
    // Predicated region
    $region34: #{tpu_custom_call.1} parent=1 // pred_check
      _
    $region35: #{tpu_custom_call.1} parent=1 // pred_check_branch
      %773 = sbr.rel (0) target = $region37
    $region36: #{tpu_custom_call.1} parent=1 // pred_region
      %775 = vsyncadd [#allocation6], 0
      %s777 = sshll.u32 [#allocation12], 4
      %s778 = int_to_ptr.vmem [resolvable:$true] %s777
      %s779 = sshll.u32 %s4, 4
      %s780 = int_to_ptr.hbm [resolvable:$true] %s779
      %782 = dma.vmem_to_hbm [thread:$0]  %s778, 256, %s780, [#allocation6]
    $region37: #{tpu_custom_call.1} parent=1 // pred_fallthru
      _
    // Predicated region
    $region38: #{tpu_custom_call.1} parent=1 // pred_check
      _
    $region39: #{tpu_custom_call.1} parent=1 // pred_check_branch
      %784 = sbr.rel (0) target = $region41
    $region40: #{tpu_custom_call.1} parent=1 // pred_region
      %786 = dma.done [#allocation6], 256
    $region41: #{tpu_custom_call.1} parent=1 // pred_fallthru
      _
    %787 = vsyncpa [#allocation5], 1
    %788 = vsyncpa [#allocation8], 1
    %789 = vsyncpa [#allocation11], 1
    %790 = vsyncpa [#allocation6], 1

</llo_original>
